<compile_context>
chip_gen: v6e
topology: v6e:2x2x1
jax: 0.10.0
libtpu: 0.0.40
codegen_flags: <defaults>
</compile_context>

<pallas_src>
import functools

import jax
import jax.numpy as jnp
import numpy as np
from jax.experimental import pallas as pl
from jax.experimental.pallas import tpu as pltpu

_LANE = 128
_VMEM_LIMIT_BYTES = 32 * 1024 * 1024   # explicit: v5e default scoped limit is 16 MiB
_TARGET_BLOCK_BYTES = 2 * 1024 * 1024  # ~2 MiB per operand block (safe on v7x's 64 MiB)
_MIN_ROW_STEPS = 8                      # keep >= ~8 row blocks when rows permit


# ----------------------------------------------------------------------------
# Kernels
# ----------------------------------------------------------------------------
def _mask_mul_kernel(x_ref, m_ref, o_ref):
    # x_ref: (TM, W); m_ref: (1, W) (row-broadcast) or (TM, W), in its stored
    # dtype -- cast in-kernel (free under the DMA bottleneck).
    o_ref[...] = x_ref[...] * m_ref[...].astype(x_ref.dtype)


def _scale_kernel(scale, x_ref, o_ref):
    # eval path: multiply by the static scalar (1 - dropout_rate)
    o_ref[...] = x_ref[...] * jnp.asarray(scale, dtype=x_ref.dtype)


# ----------------------------------------------------------------------------
# Tiling helpers
# ----------------------------------------------------------------------------
def _sublane(dtype):
    # sublane pack: 8 for 4-byte, 16 for 2-byte, 32 for 1-byte dtypes
    itemsize = jnp.dtype(dtype).itemsize
    return 8 * max(1, 4 // itemsize)


def _choose_tm(M, W, dtype):
    """Row-block size: VMEM-budgeted, sublane-rounded, keeps >=2 grid steps."""
    sub = _sublane(dtype)
    if M <= sub:
        return M  # full-dim block (always legal)
    itemsize = jnp.dtype(dtype).itemsize
    tm_budget = _TARGET_BLOCK_BYTES // max(1, W * itemsize)
    tm_pipeline = max(sub, M // _MIN_ROW_STEPS)   # keep pipelining / megacore engaged
    tm = min(M, max(sub, min(tm_budget, tm_pipeline)))
    tm = max(sub, (tm // sub) * sub)              # round to sublane multiple
    return tm


def _fold_lane_dense(total, fallback_cols, sublane):
    """Pick a lane-dense width W (multiple of 128) dividing `total`, preferring
    wide W while keeping enough rows for pipelining / 2-TC sharding."""
    divisors = [w for w in (8192, 4096, 2048, 1024, 512, 256, 128) if total % w == 0]
    if not divisors:
        return fallback_cols
    for min_rows in (_MIN_ROW_STEPS * sublane, 2 * sublane, 1):
        for w in divisors:                    # widest first
            if total // w >= min_rows:
                return w
    return divisors[0]


def _compiler_params():
    return pltpu.CompilerParams(
        dimension_semantics=("parallel",),     # row blocks shard across TCs (v7x)
        vmem_limit_bytes=_VMEM_LIMIT_BYTES,
    )


# ----------------------------------------------------------------------------
# Forward wrapper (matches DropoutLayer.forward)
# ----------------------------------------------------------------------------
def dropout_layer_forward(x, drop_mask, dropout_rate, training):
    """x: (..., input_size); drop_mask: (input_size,) or same shape as x."""
    orig_shape = x.shape
    N = orig_shape[-1]
    dtype = x.dtype
    sub = _sublane(dtype)
    cparams = _compiler_params()

    # ---- eval: x * (1 - p) --------------------------------------------------
    # NOTE: as a standalone op this at best matches XLA fusing the scale into a
    # consumer; kept as a Pallas kernel per the module spec.
    if not training:
        W = _fold_lane_dense(x.size, N, sub)
        x2 = x.reshape(-1, W)
        M = x2.shape[0]
        tm = _choose_tm(M, W, dtype)
        spec = pl.BlockSpec((tm, W), lambda i: (i, 0))
        out = pl.pallas_call(
            functools.partial(_scale_kernel, 1.0 - dropout_rate),
            out_shape=jax.ShapeDtypeStruct((M, W), dtype),
            grid=(pl.cdiv(M, tm),),
            in_specs=[spec],
            out_specs=spec,
            compiler_params=cparams,
        )(x2)
        return out.reshape(orig_shape)

    # ---- training, reset_dropout_mask-style mask (same shape as x) ----------
    if drop_mask.shape == orig_shape:
        # Pure elementwise multiply: fold BOTH tensors into one lane-dense slab.
        # No broadcast_to, no wrapper-side cast (mask DMA'd in stored dtype).
        W = _fold_lane_dense(x.size, N, sub)
        x2 = x.reshape(-1, W)
        m2 = drop_mask.reshape(-1, W)
        M = x2.shape[0]
        tm = _choose_tm(M, W, dtype)
        spec = pl.BlockSpec((tm, W), lambda i: (i, 0))
        out = pl.pallas_call(
            _mask_mul_kernel,
            out_shape=jax.ShapeDtypeStruct((M, W), dtype),
            grid=(pl.cdiv(M, tm),),
            in_specs=[spec, spec],
            out_specs=spec,
            compiler_params=cparams,
        )(x2, m2)
        return out.reshape(orig_shape)

    if drop_mask.ndim != 1:
        # Not produced by this module (masks are (N,) or x-shaped only).
        # TODO(synk): general broadcast masks delegated to XLA instead of a kernel.
        return x * drop_mask.astype(dtype)

    # ---- training, __init__-style mask: (input_size,), broadcast over rows --
    x2 = x.reshape(-1, N)
    m2 = drop_mask[None, :]                      # (1, N), stored dtype; cast in-kernel
    M = x2.shape[0]

    pad = (-N) % _LANE
    if pad:
        # keep the output lane-dense (avoid masked partial stores for small N)
        x2 = jnp.pad(x2, ((0, 0), (0, pad)))
        m2 = jnp.pad(m2, ((0, 0), (0, pad)))
    W = N + pad

    tm = _choose_tm(M, W, dtype)
    x_spec = pl.BlockSpec((tm, W), lambda i: (i, 0))
    m_spec = pl.BlockSpec((1, W), lambda i: (0, 0))   # resident, broadcast over rows
    out = pl.pallas_call(
        _mask_mul_kernel,
        out_shape=jax.ShapeDtypeStruct((M, W), dtype),
        grid=(pl.cdiv(M, tm),),
        in_specs=[x_spec, m_spec],
        out_specs=x_spec,
        compiler_params=cparams,
    )(x2, m2)
    if pad:
        out = out[:, :N]
    return out.reshape(orig_shape)


# ----------------------------------------------------------------------------
# Pure-JAX reference (mirrors the PyTorch module)
# ----------------------------------------------------------------------------
def dropout_layer_ref(x, drop_mask, dropout_rate, training):
    if training:
        return x * drop_mask.astype(x.dtype)
    return x * (1.0 - dropout_rate)


# ----------------------------------------------------------------------------
# Test driver
# ----------------------------------------------------------------------------
if __name__ == "__main__":
    batch_size, input_size = 32, 256
    dropout_rate = 0.25

    key = jax.random.PRNGKey(0)
    kx, km1, km2 = jax.random.split(key, 3)

    x = jax.random.normal(kx, (batch_size, input_size), jnp.float32)

    # __init__-style mask: shape (input_size,), bernoulli(1 - p), f32
    mask_1d = jax.random.bernoulli(km1, 1.0 - dropout_rate,
                                   (input_size,)).astype(jnp.float32)
    # reset_dropout_mask-style mask: shape (batch, input_size); stored bf16 to
    # exercise the in-kernel cast / narrower-mask-DMA path (0/1 exact in bf16)
    mask_2d = jax.random.bernoulli(km2, 1.0 - dropout_rate,
                                   (batch_size, input_size)).astype(jnp.bfloat16)

    # training mode, 1-D mask (broadcast over batch)
    out_tr1 = jax.block_until_ready(
        dropout_layer_forward(x, mask_1d, dropout_rate, training=True))
    ref_tr1 = dropout_layer_ref(x, mask_1d, dropout_rate, training=True)
    np.testing.assert_allclose(np.asarray(out_tr1), np.asarray(ref_tr1),
                               rtol=1e-6, atol=1e-6)

    # training mode, 2-D mask (after reset_dropout_mask)
    out_tr2 = jax.block_until_ready(
        dropout_layer_forward(x, mask_2d, dropout_rate, training=True))
    ref_tr2 = dropout_layer_ref(x, mask_2d, dropout_rate, training=True)
    np.testing.assert_allclose(np.asarray(out_tr2), np.asarray(ref_tr2),
                               rtol=1e-6, atol=1e-6)

    # eval mode: x * (1 - dropout_rate)
    out_ev = jax.block_until_ready(
        dropout_layer_forward(x, mask_1d, dropout_rate, training=False))
    ref_ev = dropout_layer_ref(x, mask_1d, dropout_rate, training=False)
    np.testing.assert_allclose(np.asarray(out_ev), np.asarray(ref_ev),
                               rtol=1e-6, atol=1e-6)

    print("KERNEL_OK")
</pallas_src>

<mosaic_0001>
module attributes {stable_mosaic.version = 11 : i64} {
  func.func @_mask_mul_kernel(%arg0: i32, %arg1: memref<8x256xf32, #tpu.memory_space<vmem>>, %arg2: memref<1x256xf32, #tpu.memory_space<vmem>>, %arg3: memref<8x256xf32, #tpu.memory_space<vmem>>) attributes {dimension_semantics = [#tpu.dimension_semantics<parallel>], iteration_bounds = array<i64: 4>, scalar_prefetch = 0 : i64, scratch_operands = 0 : i64, tpu.core_type = #tpu.core_type<tc>, window_params = [{transform_indices = @transform_0, window_bounds = array<i64: 8, 256>}, {pipeline_mode = #tpu.pipeline_mode<synchronous>, transform_indices = @transform_1, window_bounds = array<i64: 1, 256>}, {transform_indices = @transform_2, window_bounds = array<i64: 8, 256>}]} {
    %c0 = arith.constant 0 : index
    %c0_0 = arith.constant 0 : index
    %0 = vector.load %arg1[%c0, %c0_0] : memref<8x256xf32, #tpu.memory_space<vmem>>, vector<8x256xf32>
    %c0_1 = arith.constant 0 : index
    %c0_2 = arith.constant 0 : index
    %1 = vector.load %arg2[%c0_1, %c0_2] : memref<1x256xf32, #tpu.memory_space<vmem>>, vector<1x256xf32>
    %2 = vector.broadcast %1 : vector<1x256xf32> to vector<8x256xf32>
    %3 = arith.mulf %0, %2 : vector<8x256xf32>
    %c0_3 = arith.constant 0 : index
    %c0_4 = arith.constant 0 : index
    %4 = vector.load %arg3[%c0_3, %c0_4] : memref<8x256xf32, #tpu.memory_space<vmem>>, vector<8x256xf32>
    tpu.vector_store %arg3[%c0_3, %c0_4], %3 {strides = array<i32>} : memref<8x256xf32, #tpu.memory_space<vmem>>, vector<8x256xf32>,
    return
  }
  func.func @transform_0(%arg0: i32) -> (i32, i32) {
    %c0_i32 = arith.constant 0 : i32
    %c0_i32_0 = arith.constant 0 : i32
    return %arg0, %c0_i32 : i32, i32
  }
  func.func @transform_1(%arg0: i32) -> (i32, i32) {
    %c0_i32 = arith.constant 0 : i32
    %c0_i32_0 = arith.constant 0 : i32
    %c0_i32_1 = arith.constant 0 : i32
    return %c0_i32, %c0_i32_0 : i32, i32
  }
  func.func @transform_2(%arg0: i32) -> (i32, i32) {
    %c0_i32 = arith.constant 0 : i32
    %c0_i32_0 = arith.constant 0 : i32
    return %arg0, %c0_i32 : i32, i32
  }
}

</mosaic_0001>

<llo_original>
// kernel: tpu_custom_call.1
$region0: #{tpu_custom_call.1}
  #allocation0 [shape = 'u32[]', space=smem, size = 0x4, offset = 0x4, fixed_abs, tag = 'smem constant byte address 0x4 - core index']
  #allocation1 [shape = 'u32[144,128]{1,0:T(1,128)}', space=vmem, size = 0x12000, scoped, tag = 'internal scratch']
  %s0 = inlined_call_operand.hbm [shape: f32[32,256], index: 0, kind: input, shape index: {}]
  %s1 = inlined_call_operand.hbm [shape: f32[1,256], index: 1, kind: input, shape index: {}]
  %s2 = inlined_call_operand.hbm [shape: f32[32,256], index: 2, kind: output, shape index: {}]
  %s3 = sld [smem:[#allocation0]]
  $region49: #{tpu_custom_call.1} parent=0
    _
  %s5 = ssub.s32 1, %s3
  %s6 = scalar_select 0, %s5, %s3
  $region1: #{tpu_custom_call.1} parent=0
    #allocation2 [shape = 'u8[16384]{0}', space=vmem, size = 0x4000, scoped, tag = 'input window, operand 0']
    #allocation3 [shape = 's32[2]{0}', space=sflag, size = 0x8, scoped, tag = 'scoped memory for tpu_custom_call.1']
    #allocation4 [shape = 's32[2]{0}', space=sflag, size = 0x8, scoped, tag = 'scoped memory for tpu_custom_call.1']
    #allocation5 [shape = 'u8[1024]{0}', space=vmem, size = 0x400, scoped, tag = 'input window, operand 1, single buffered']
    #allocation6 [shape = 's32[1]{0}', space=sflag, size = 0x4, scoped, tag = 'scoped memory for tpu_custom_call.1']
    #allocation7 [shape = 'u8[16384]{0}', space=vmem, size = 0x4000, scoped, tag = 'output window, operand 0']
    %7 = vsyncpa [#allocation3], 0
    %s8 = scalar_lea.sflag [#allocation3], 1
    %9 = vsyncpa %s8, 0
    %10 = vsyncpa [#allocation6], 0
    %11 = vsyncpa [#allocation4], 0
    %s12 = scalar_lea.sflag [#allocation4], 1
    %13 = vsyncpa %s12, 0
    loop: start=0, step=1, limit=6
    $region2: #{tpu_custom_call.1} parent=1 // loop_pre_header
      _
    $region3: #{tpu_custom_call.1} parent=1 // loop_header
      %s15 = sphi 0, %s19
      %p16 = scmp.ge.s32.totalorder %s15, 6
      %s25 = sphi 0, %s27
      %s28 = sphi 0, %s25
      %s29 = sphi 0, %s28
      %s45 = sphi 0, %s29
      %s49 = sphi 0, %s49
      %s51 = sphi 0, %s49
      %s52 = sphi 0, %s51
      %s66 = sphi 0, %s52
      %s72 = sphi 0, %s74
      %s75 = sphi 0, %s72
      %s76 = sphi 0, %s75
      %s92 = sphi 0, %s76
    $region4: #{tpu_custom_call.1} parent=1 // loop_header_branch
      %18 = sbr.rel (%p16) target = $region8
    $region5: #{tpu_custom_call.1} parent=1 // loop_body
      %s20 = ssub.s32 %s15, 1
      %s21 = ssub.s32 %s15, 2
      %s22 = sadd.s32 %s15, 1
      %s23 = ssub.s32 %s15, %s22
      %p24 = scmp.eq.s32.totalorder %s23, 0
      %s26 = sadd.s32 %s25, 1
      %s27 = scalar_select %p24, %s25, %s26
      %p30 = pneg %p24
      %p31 = scmp.eq.s32.totalorder %s15, 3
      %p32 = por %p30, %p31
      %p33 = scmp.ne.s32.totalorder %s25, %s28
      %p34 = scmp.eq.s32.totalorder %s15, 0
      %p35 = por %p33, %p34
      %p36 = scmp.ne.s32.totalorder %s25, %s28
      %p37 = scmp.eq.s32.totalorder %s20, 3
      %p38 = por %p36, %p37
      %p39 = scmp.ne.s32.totalorder %s28, %s29
      %p40 = scmp.eq.s32.totalorder %s20, 0
      %p41 = por %p39, %p40
      %p42 = scmp.ne.s32.totalorder %s28, %s29
      %p43 = scmp.eq.s32.totalorder %s21, 3
      %p44 = por %p42, %p43
      %p46 = scmp.ne.s32.totalorder %s29, %s45
      %p47 = scmp.eq.s32.totalorder %s21, 0
      %p48 = por %p46, %p47
      %s50 = sadd.s32 %s49, 1
      %p53 = scmp.eq.s32.totalorder %s15, 3
      %p54 = scmp.ne.s32.totalorder %s49, %s51
      %p55 = scmp.eq.s32.totalorder %s15, 0
      %p56 = por %p54, %p55
      %p57 = scmp.ne.s32.totalorder %s49, %s51
      %p58 = scmp.eq.s32.totalorder %s20, 3
      %p59 = por %p57, %p58
      %p60 = scmp.ne.s32.totalorder %s51, %s52
      %p61 = scmp.eq.s32.totalorder %s20, 0
      %p62 = por %p60, %p61
      %p63 = scmp.ne.s32.totalorder %s51, %s52
      %p64 = scmp.eq.s32.totalorder %s21, 3
      %p65 = por %p63, %p64
      %p67 = scmp.ne.s32.totalorder %s52, %s66
      %p68 = scmp.eq.s32.totalorder %s21, 0
      %p69 = por %p67, %p68
      %s70 = ssub.s32 %s15, %s22
      %p71 = scmp.eq.s32.totalorder %s70, 0
      %s73 = sadd.s32 %s72, 1
      %s74 = scalar_select %p71, %s72, %s73
      %p77 = pneg %p71
      %p78 = scmp.eq.s32.totalorder %s15, 3
      %p79 = por %p77, %p78
      %p80 = scmp.ne.s32.totalorder %s72, %s75
      %p81 = scmp.eq.s32.totalorder %s15, 0
      %p82 = por %p80, %p81
      %p83 = scmp.ne.s32.totalorder %s72, %s75
      %p84 = scmp.eq.s32.totalorder %s20, 3
      %p85 = por %p83, %p84
      %p86 = scmp.ne.s32.totalorder %s75, %s76
      %p87 = scmp.eq.s32.totalorder %s20, 0
      %p88 = por %p86, %p87
      %p89 = scmp.ne.s32.totalorder %s75, %s76
      %p90 = scmp.eq.s32.totalorder %s21, 3
      %p91 = por %p89, %p90
      %p93 = scmp.ne.s32.totalorder %s76, %s92
      %p94 = scmp.eq.s32.totalorder %s21, 0
      %p95 = por %p93, %p94
      %p96 = scmp.le.s32.totalorder 1, %s15
      %p97 = scmp.lt.s32.totalorder %s15, 5
      %p98 = pnand %p96, %p97
      %p99 = pneg %p98
      // Predicated region
      $region9: #{tpu_custom_call.1} parent=5 // pred_check
        _
      $region10: #{tpu_custom_call.1} parent=5 // pred_check_branch
        %101 = sbr.rel (%p98) target = $region12
      $region11: #{tpu_custom_call.1} parent=5 // pred_region
        %s102 = ssub.s32 %s15, 1
        // Predicated region
        $region13: #{tpu_custom_call.1} parent=11 // pred_check
          %p103 = pneg %p62
        $region14: #{tpu_custom_call.1} parent=11 // pred_check_branch
          %105 = sbr.rel (%p103) target = $region16
        $region15: #{tpu_custom_call.1} parent=11 // pred_region
          %s107 = ssub.s32 32, 32
          %108 = vsyncadd [#allocation6], %s107
          %s110 = sshll.u32 [#allocation5], 4
          %s111 = int_to_ptr.vmem [resolvable:$true] %s110
          %113 = dma.hbm_to_vmem [thread:$0]  %s1, 32, %s111, [#allocation6]
        $region16: #{tpu_custom_call.1} parent=11 // pred_fallthru
          _
      $region12: #{tpu_custom_call.1} parent=5 // pred_fallthru
        _
      %p114 = scmp.lt.s32.totalorder %s15, 4
      // Predicated region
      $region17: #{tpu_custom_call.1} parent=5 // pred_check
        %p115 = pneg %p114
      $region18: #{tpu_custom_call.1} parent=5 // pred_check_branch
        %117 = sbr.rel (%p115) target = $region20
      $region19: #{tpu_custom_call.1} parent=5 // pred_region
        // Predicated region
        $region21: #{tpu_custom_call.1} parent=19 // pred_check
          %p118 = pneg %p35
        $region22: #{tpu_custom_call.1} parent=19 // pred_check_branch
          %120 = sbr.rel (%p118) target = $region24
        $region23: #{tpu_custom_call.1} parent=19 // pred_region
          %s121 = sand.u32 %s25, 1
          %s122 = scalar_lea.sflag [#allocation3], %s121
          %s123 = sand.u32 %s25, 1
          %s124 = smul.addr %s123, 16
          %s125 = scalar_lea.vmem [#allocation2], %s124
          %s127 = ssub.s32 256, 256
          %128 = vsyncadd %s122, %s127
          %s129 = smul.addr %s15, 2
          %s130 = smul.addr %s129, 128
          %s131 = scalar_lea.hbm %s0, %s130
          %s133 = sshll.u32 %s125, 4
          %s134 = int_to_ptr.vmem [resolvable:$true] %s133
          %136 = dma.hbm_to_vmem [thread:$0]  %s131, 256, %s134, %s122
        $region24: #{tpu_custom_call.1} parent=19 // pred_fallthru
          _
      $region20: #{tpu_custom_call.1} parent=5 // pred_fallthru
        _
      %p137 = scmp.le.s32.totalorder 1, %s15
      %p138 = scmp.lt.s32.totalorder %s15, 5
      %p139 = pnand %p137, %p138
      %p140 = pneg %p139
      // Predicated region
      $region25: #{tpu_custom_call.1} parent=5 // pred_check
        _
      $region26: #{tpu_custom_call.1} parent=5 // pred_check_branch
        %142 = sbr.rel (%p139) target = $region28
      $region27: #{tpu_custom_call.1} parent=5 // pred_region
        %s143 = ssub.s32 %s15, 1
        %s144 = sand.u32 %s28, 1
        %s145 = scalar_lea.sflag [#allocation3], %s144
        %s146 = sand.u32 %s28, 1
        %s147 = smul.addr %s146, 16
        %s148 = scalar_lea.vmem [#allocation2], %s147
        // Predicated region
        $region29: #{tpu_custom_call.1} parent=27 // pred_check
          %p149 = pneg %p41
        $region30: #{tpu_custom_call.1} parent=27 // pred_check_branch
          %151 = sbr.rel (%p149) target = $region32
        $region31: #{tpu_custom_call.1} parent=27 // pred_region
          %152 = dma.done %s145, 256
        $region32: #{tpu_custom_call.1} parent=27 // pred_fallthru
          _
        // Predicated region
        $region33: #{tpu_custom_call.1} parent=27 // pred_check
          %p153 = pneg %p62
        $region34: #{tpu_custom_call.1} parent=27 // pred_check_branch
          %155 = sbr.rel (%p153) target = $region36
        $region35: #{tpu_custom_call.1} parent=27 // pred_region
          %156 = dma.done [#allocation6], 32
        $region36: #{tpu_custom_call.1} parent=27 // pred_fallthru
          _
        %s157 = sand.u32 %s28, 1
        %s158 = scalar_lea.sflag [#allocation3], %s157
        %s159 = sand.u32 %s28, 1
        %s160 = smul.addr %s159, 16
        %s161 = scalar_lea.vmem [#allocation2], %s160
        %p162 = pneg %p41
        %p163 = pneg %p38
        %p164 = pneg %p62
        %p165 = pneg %p59
        %p166 = pneg %p88
        %p167 = pneg %p85
        %s168 = sand.u32 %s75, 1
        %s169 = scalar_lea.sflag [#allocation4], %s168
        %s170 = sand.u32 %s75, 1
        %s171 = smul.addr %s170, 16
        %s172 = scalar_lea.vmem [#allocation7], %s171
        %v173 = vld [vmem:[%s148] sm:$0xff]
        %v174 = vld [vmem:[%s148 + $0x8] sm:$0xff]
        %v175 = vld [vmem:[#allocation5] sm:$0x3]
        %v177 = vlaneseq
        %v178 = vshrl.u32 %v177, 7
        %v179 = vsub.s32 0, %v178
        %v180 = vrot.slane %v175, %v179
        %v181 = vlaneseq
        %v182 = vshrl.u32 %v181, 7
        %v183 = vsub.s32 1, %v182
        %v184 = vrot.slane %v175, %v183
        %v187 = vmul.f32 %v173, %v180
        %v188 = vmul.f32 %v174, %v184
        %189 = vst [vmem:[%s172] sm:$0xff] %v187
        %190 = vst [vmem:[%s172 + $0x8] sm:$0xff] %v188
        %s191 = sand.u32 %s75, 1
        %s192 = scalar_lea.sflag [#allocation4], %s191
        %s193 = sand.u32 %s75, 1
        %s194 = smul.addr %s193, 16
        %s195 = scalar_lea.vmem [#allocation7], %s194
        // Predicated region
        $region37: #{tpu_custom_call.1} parent=27 // pred_check
          %p196 = pneg %p85
        $region38: #{tpu_custom_call.1} parent=27 // pred_check_branch
          %198 = sbr.rel (%p196) target = $region40
        $region39: #{tpu_custom_call.1} parent=27 // pred_region
          %s200 = ssub.s32 256, 256
          %201 = vsyncadd %s192, %s200
          %s202 = smul.addr %s20, 2
          %s203 = smul.addr %s202, 128
          %s204 = scalar_lea.hbm %s2, %s203
          %s206 = sshll.u32 %s195, 4
          %s207 = int_to_ptr.vmem [resolvable:$true] %s206
          %209 = dma.vmem_to_hbm [thread:$0]  %s207, 256, %s204, %s192
        $region40: #{tpu_custom_call.1} parent=27 // pred_fallthru
          _
      $region28: #{tpu_custom_call.1} parent=5 // pred_fallthru
        _
      %p210 = scmp.le.s32.totalorder 2, %s15
      // Predicated region
      $region41: #{tpu_custom_call.1} parent=5 // pred_check
        %p211 = pneg %p210
      $region42: #{tpu_custom_call.1} parent=5 // pred_check_branch
        %213 = sbr.rel (%p211) target = $region44
      $region43: #{tpu_custom_call.1} parent=5 // pred_region
        %s214 = ssub.s32 %s15, 2
        // Predicated region
        $region45: #{tpu_custom_call.1} parent=43 // pred_check
          %p215 = pneg %p91
        $region46: #{tpu_custom_call.1} parent=43 // pred_check_branch
          %217 = sbr.rel (%p215) target = $region48
        $region47: #{tpu_custom_call.1} parent=43 // pred_region
          %s218 = sand.u32 %s76, 1
          %s219 = scalar_lea.sflag [#allocation4], %s218
          %s220 = sand.u32 %s76, 1
          %s221 = smul.addr %s220, 16
          %s222 = scalar_lea.vmem [#allocation7], %s221
          %223 = dma.done %s219, 256
        $region48: #{tpu_custom_call.1} parent=43 // pred_fallthru
          _
      $region44: #{tpu_custom_call.1} parent=5 // pred_fallthru
        _
    $region6: #{tpu_custom_call.1} parent=1 // loop_footer
      %s19 = sadd.s32 1, %s15
    $region7: #{tpu_custom_call.1} parent=1 // loop_footer_branch
      %14 = sbr.rel target = $region3
    $region8: #{tpu_custom_call.1} parent=1 // loop_exit
      _
    %224 = vsyncpa [#allocation3], 1
    %s225 = scalar_lea.sflag [#allocation3], 1
    %226 = vsyncpa %s225, 1
    %227 = vsyncpa [#allocation6], 1
    %228 = vsyncpa [#allocation4], 1
    %s229 = scalar_lea.sflag [#allocation4], 1
    %230 = vsyncpa %s229, 1

</llo_original>
